<compile_context>
chip_gen: v7x
topology: tpu7x:2x2x1
jax: 0.10.0
libtpu: 0.0.40
codegen_flags: <defaults>
</compile_context>

<pallas_src>
import jax
import jax.numpy as jnp
from jax.experimental import pallas as pl
from jax.experimental.pallas import tpu as pltpu

FEATURE_DIM = 32
POLICY_ARCH = [64, 64, 32]
VALUE_ARCH = [64, 32]
BN_EPS = 1e-5

HIDDEN = POLICY_ARCH[0]        # 64  (== VALUE_ARCH[0])
PACK = 2 * HIDDEN              # 128 packed lane width (policy | value)
OUT_P = POLICY_ARCH[-1]        # 32  (both heads emit 32 features)

# Row offsets inside the packed weight slab (all multiples of 8 sublanes).
W0_OFF = 0                          # rows   0: 32  -> [policy w0 | value w0]
W1_OFF = FEATURE_DIM                # rows  32:160  -> [folded policy w1 | I]
W2P_OFF = FEATURE_DIM + PACK        # rows 160:288  -> policy w2 in lanes 0:32
W2V_OFF = FEATURE_DIM + 2 * PACK    # rows 288:416  -> value  w1 in lanes 0:32
W_ROWS = FEATURE_DIM + 3 * PACK     # 416

# Fixed tile candidates: avoids a fresh compile per odd batch size while still
# letting large batches use big tiles (amortizes per-grid-step overhead).
_TILE_CANDIDATES = (8, 64, 512, 2048)


# ----------------------------- Pallas kernel ------------------------------- #

def _fused_net_kernel(x_ref, w_ref, b_ref, pi_ref, vf_ref):
    """One batch tile of both networks.

    x_ref:  (TB, 32)    input features
    w_ref:  (416, 128)  packed weights (see row-offset constants above)
    b_ref:  (4, 128)    packed biases  [b0; b1; b2_policy; b2_value]
    pi_ref: (TB, 32)    policy latent
    vf_ref: (TB, 32)    value latent
    """
    x = x_ref[...]                                        # (TB, 32)
    w0 = w_ref[W0_OFF:W0_OFF + FEATURE_DIM, :]            # (32, 128)
    w1 = w_ref[W1_OFF:W1_OFF + PACK, :]                   # (128, 128)
    w2p = w_ref[W2P_OFF:W2P_OFF + PACK, 0:OUT_P]          # (128, 32)
    w2v = w_ref[W2V_OFF:W2V_OFF + PACK, 0:OUT_P]          # (128, 32)

    # Single-row policy/value lane mask; jnp.where broadcasts it over the tile.
    lane = jax.lax.broadcasted_iota(jnp.int32, (1, PACK), 1)
    is_policy = lane < HIDDEN                              # lanes 0:64 -> policy

    # Layer 0: [policy Linear(32,64) | value Linear(32,64)] in one matmul,
    # then Tanh on policy lanes, ReLU on value lanes.
    z0 = jnp.dot(x, w0, preferred_element_type=jnp.float32) + b_ref[0:1, :]
    h0 = jnp.where(is_policy, jnp.tanh(z0), jnp.maximum(z0, 0.0))

    # Layer 1: policy Linear(64,64) with eval-mode BN folded in; value lanes
    # ride through an identity block.  Tanh on policy lanes only (Dropout is
    # identity in eval mode).
    z1 = jnp.dot(h0, w1, preferred_element_type=jnp.float32) + b_ref[1:2, :]
    h1 = jnp.where(is_policy, jnp.tanh(z1), z1)

    # Layer 2: separate narrow heads (policy Linear(64,32), value Linear(64,32)
    # -- the value head uses policy_activation per the reference module).
    zp = jnp.dot(h1, w2p, preferred_element_type=jnp.float32) + b_ref[2:3, 0:OUT_P]
    zv = jnp.dot(h1, w2v, preferred_element_type=jnp.float32) + b_ref[3:4, 0:OUT_P]
    pi_ref[...] = jnp.tanh(zp)
    vf_ref[...] = jnp.tanh(zv)


# ------------------------------ JAX wrapper -------------------------------- #

def _choose_tile_b(batch):
    """Largest fixed-candidate tile that still leaves >= 2 grid steps."""
    bp8 = ((batch + 7) // 8) * 8
    tile = _TILE_CANDIDATES[0]
    for t in _TILE_CANDIDATES:
        # >= 2 grid steps whenever possible so both v7x TensorCores get work
        # from the "parallel" batch axis; cap at 2048 rows so the per-step
        # working set stays well under every generation's scoped VMEM default.
        if bp8 >= 2 * t:
            tile = t
    return tile


def custom_network_forward(x, packed_w, packed_b):
    """Returns (policy_latent (B,32), value_latent (B,32))."""
    b = x.shape[0]
    tile_b = _choose_tile_b(b)
    bp = ((b + tile_b - 1) // tile_b) * tile_b
    xp = jnp.pad(x, ((0, bp - b), (0, 0))) if bp != b else x
    grid = (bp // tile_b,)

    pi, vf = pl.pallas_call(
        _fused_net_kernel,
        out_shape=(jax.ShapeDtypeStruct((bp, OUT_P), jnp.float32),
                   jax.ShapeDtypeStruct((bp, OUT_P), jnp.float32)),
        grid=grid,
        in_specs=[
            pl.BlockSpec((tile_b, FEATURE_DIM), lambda i: (i, 0)),
            pl.BlockSpec(packed_w.shape, lambda i: (0, 0)),   # weights resident
            pl.BlockSpec(packed_b.shape, lambda i: (0, 0)),   # biases resident
        ],
        out_specs=(pl.BlockSpec((tile_b, OUT_P), lambda i: (i, 0)),
                   pl.BlockSpec((tile_b, OUT_P), lambda i: (i, 0))),
        compiler_params=pltpu.CompilerParams(
            dimension_semantics=("parallel",)),
    )(xp, packed_w, packed_b)

    if bp != b:
        pi, vf = pi[:b], vf[:b]
    return pi, vf


# ----------------------------- Parameter prep ------------------------------ #

def _init_linear(key, fan_in, fan_out):
    kw, kb = jax.random.split(key)
    bound = 1.0 / jnp.sqrt(jnp.float32(fan_in))
    w = jax.random.uniform(kw, (fan_in, fan_out), jnp.float32, -bound, bound)
    b = jax.random.uniform(kb, (1, fan_out), jnp.float32, -bound, bound)
    return w, b


def init_params(key):
    keys = jax.random.split(key, 8)
    # Policy net.
    w0, b0 = _init_linear(keys[0], FEATURE_DIM, POLICY_ARCH[0])
    w1, b1 = _init_linear(keys[1], POLICY_ARCH[0], POLICY_ARCH[1])
    w2, b2 = _init_linear(keys[2], POLICY_ARCH[1], POLICY_ARCH[2])
    # BatchNorm1d(64) eval-mode params (deterministic, non-trivial).
    c = POLICY_ARCH[1]
    gamma = 1.0 + 0.1 * jax.random.normal(keys[3], (1, c), jnp.float32)
    beta = 0.1 * jax.random.normal(keys[4], (1, c), jnp.float32)
    run_mean = 0.05 * jax.random.normal(keys[5], (1, c), jnp.float32)
    run_var = 0.5 + jnp.abs(jax.random.normal(keys[6], (1, c), jnp.float32))
    bn_scale = gamma / jnp.sqrt(run_var + BN_EPS)
    bn_shift = beta - run_mean * bn_scale
    policy_params = dict(w0=w0, b0=b0, w1=w1, b1=b1,
                         bn_scale=bn_scale, bn_shift=bn_shift, w2=w2, b2=b2)
    # Value net.
    vkeys = jax.random.split(keys[7], 2)
    vw0, vb0 = _init_linear(vkeys[0], FEATURE_DIM, VALUE_ARCH[0])
    vw1, vb1 = _init_linear(vkeys[1], VALUE_ARCH[-2], POLICY_ARCH[-1])
    value_params = dict(w0=vw0, b0=vb0, w1=vw1, b1=vb1)
    return policy_params, value_params


def pack_params(pp, vp):
    """Fold BN and pack both nets into one (416,128) weight + (4,128) bias slab."""
    # Layer 0: policy w0 | value w0 side by side (lane-dense 128 wide).
    w0 = jnp.concatenate([pp["w0"], vp["w0"]], axis=1)                 # (32, 128)
    b0 = jnp.concatenate([pp["b0"], vp["b0"]], axis=1)                 # (1, 128)

    # Layer 1: fold eval-mode BN into policy w1/b1; identity block for value.
    w1f = pp["w1"] * pp["bn_scale"]                                    # column-scaled
    b1f = pp["b1"] * pp["bn_scale"] + pp["bn_shift"]
    w1 = jnp.zeros((PACK, PACK), jnp.float32)
    w1 = w1.at[:HIDDEN, :HIDDEN].set(w1f)
    w1 = w1.at[HIDDEN:, HIDDEN:].set(jnp.eye(HIDDEN, dtype=jnp.float32))
    b1 = jnp.concatenate([b1f, jnp.zeros((1, HIDDEN), jnp.float32)], axis=1)

    # Layer 2: policy and value heads in SEPARATE row ranges, both in lanes
    # 0:32, so every in-kernel slice starts at lane 0.
    w2p = jnp.zeros((PACK, PACK), jnp.float32)
    w2p = w2p.at[:HIDDEN, :OUT_P].set(pp["w2"])
    w2v = jnp.zeros((PACK, PACK), jnp.float32)
    w2v = w2v.at[HIDDEN:, :OUT_P].set(vp["w1"])
    b2p = jnp.zeros((1, PACK), jnp.float32).at[:, :OUT_P].set(pp["b2"])
    b2v = jnp.zeros((1, PACK), jnp.float32).at[:, :OUT_P].set(vp["b1"])

    packed_w = jnp.concatenate([w0, w1, w2p, w2v], axis=0)             # (416, 128)
    packed_b = jnp.concatenate([b0, b1, b2p, b2v], axis=0)             # (4, 128)
    assert packed_w.shape == (W_ROWS, PACK)
    return packed_w, packed_b


# ---------------------------- Reference (JAX) ------------------------------ #

def _reference_forward(x, pp, vp):
    h = jnp.tanh(x @ pp["w0"] + pp["b0"])
    h = (h @ pp["w1"] + pp["b1"]) * pp["bn_scale"] + pp["bn_shift"]
    h = jnp.tanh(h)
    pi = jnp.tanh(h @ pp["w2"] + pp["b2"])
    g = jnp.maximum(x @ vp["w0"] + vp["b0"], 0.0)
    vf = jnp.tanh(g @ vp["w1"] + vp["b1"])
    return pi, vf


if __name__ == "__main__":
    key = jax.random.PRNGKey(0)
    k_params, k_x, k_x2 = jax.random.split(key, 3)
    policy_params, value_params = init_params(k_params)
    packed_w, packed_b = pack_params(policy_params, value_params)

    # Small-batch path (grid=(1,), tile 8) — the shipped configuration.
    batch = 8
    features = jax.random.normal(k_x, (batch, FEATURE_DIM), jnp.float32)
    pi, vf = custom_network_forward(features, packed_w, packed_b)
    pi, vf = jax.block_until_ready((pi, vf))
    pi_ref, vf_ref = _reference_forward(features, policy_params, value_params)
    assert pi.shape == (batch, POLICY_ARCH[-1])
    assert vf.shape == (batch, POLICY_ARCH[-1])
    assert jnp.allclose(pi, pi_ref, atol=2e-5, rtol=2e-5)
    assert jnp.allclose(vf, vf_ref, atol=2e-5, rtol=2e-5)

    # Larger ragged batch exercises the tiled/padded multi-step grid path
    # (tile 512, grid 3 on 1200 rows).
    batch2 = 1200
    features2 = jax.random.normal(k_x2, (batch2, FEATURE_DIM), jnp.float32)
    pi2, vf2 = custom_network_forward(features2, packed_w, packed_b)
    pi2, vf2 = jax.block_until_ready((pi2, vf2))
    pi2_ref, vf2_ref = _reference_forward(features2, policy_params, value_params)
    assert pi2.shape == (batch2, POLICY_ARCH[-1])
    assert vf2.shape == (batch2, POLICY_ARCH[-1])
    assert jnp.allclose(pi2, pi2_ref, atol=2e-5, rtol=2e-5)
    assert jnp.allclose(vf2, vf2_ref, atol=2e-5, rtol=2e-5)

    print("KERNEL_OK")
</pallas_src>

<mosaic_0001>
module attributes {stable_mosaic.version = 11 : i64} {
  func.func @_fused_net_kernel(%arg0: i32, %arg1: memref<8x32xf32, #tpu.memory_space<vmem>>, %arg2: memref<416x128xf32, #tpu.memory_space<vmem>>, %arg3: memref<4x128xf32, #tpu.memory_space<vmem>>, %arg4: memref<8x32xf32, #tpu.memory_space<vmem>>, %arg5: memref<8x32xf32, #tpu.memory_space<vmem>>) attributes {dimension_semantics = [#tpu.dimension_semantics<parallel>], iteration_bounds = array<i64: 1>, scalar_prefetch = 0 : i64, scratch_operands = 0 : i64, tpu.core_type = #tpu.core_type<tc>, window_params = [{transform_indices = @transform_0, window_bounds = array<i64: 8, 32>}, {pipeline_mode = #tpu.pipeline_mode<synchronous>, transform_indices = @transform_1, window_bounds = array<i64: 416, 128>}, {pipeline_mode = #tpu.pipeline_mode<synchronous>, transform_indices = @transform_2, window_bounds = array<i64: 4, 128>}, {transform_indices = @transform_3, window_bounds = array<i64: 8, 32>}, {transform_indices = @transform_4, window_bounds = array<i64: 8, 32>}]} {
    %c0 = arith.constant 0 : index
    %c0_0 = arith.constant 0 : index
    %0 = vector.load %arg1[%c0, %c0_0] : memref<8x32xf32, #tpu.memory_space<vmem>>, vector<8x32xf32>
    %c0_1 = arith.constant 0 : index
    %c0_2 = arith.constant 0 : index
    %1 = vector.load %arg2[%c0_1, %c0_2] : memref<416x128xf32, #tpu.memory_space<vmem>>, vector<32x128xf32>
    %c32 = arith.constant 32 : index
    %c0_3 = arith.constant 0 : index
    %2 = vector.load %arg2[%c32, %c0_3] : memref<416x128xf32, #tpu.memory_space<vmem>>, vector<128x128xf32>
    %c160 = arith.constant 160 : index
    %c0_4 = arith.constant 0 : index
    %3 = vector.load %arg2[%c160, %c0_4] : memref<416x128xf32, #tpu.memory_space<vmem>>, vector<128x32xf32>
    %c288 = arith.constant 288 : index
    %c0_5 = arith.constant 0 : index
    %4 = vector.load %arg2[%c288, %c0_5] : memref<416x128xf32, #tpu.memory_space<vmem>>, vector<128x32xf32>
    %5 = tpu.iota {dimensions = array<i32: 1>} : vector<1x128xi32>
    %c64_i32 = arith.constant 64 : i32
    %6 = vector.broadcast %c64_i32 : i32 to vector<1x128xi32>
    %7 = arith.cmpi slt, %5, %6 : vector<1x128xi32>
    %cst = arith.constant dense<0.000000e+00> : vector<8x128xf32>
    %8 = tpu.matmul %0, %1, %cst {dimension_numbers = #tpu.dot_dimension_numbers<[1], [0], [0], [1], [0, 0, 1, 1], [], []>} : vector<8x32xf32>, vector<32x128xf32>, vector<8x128xf32> -> vector<8x128xf32>
    %c0_6 = arith.constant 0 : index
    %c0_7 = arith.constant 0 : index
    %9 = vector.load %arg3[%c0_6, %c0_7] : memref<4x128xf32, #tpu.memory_space<vmem>>, vector<1x128xf32>
    %10 = vector.broadcast %9 : vector<1x128xf32> to vector<8x128xf32>
    %11 = arith.addf %8, %10 : vector<8x128xf32>
    %12 = math.tanh %11 : vector<8x128xf32>
    %cst_8 = arith.constant 0.000000e+00 : f32
    %13 = vector.broadcast %cst_8 : f32 to vector<8x128xf32>
    %14 = arith.maximumf %11, %13 : vector<8x128xf32>
    %15 = vector.shape_cast %7 : vector<1x128xi1> to vector<1x128xi1>
    %16 = vector.broadcast %15 : vector<1x128xi1> to vector<8x128xi1>
    %17 = arith.select %16, %12, %14 : vector<8x128xi1>, vector<8x128xf32>
    %cst_9 = arith.constant dense<0.000000e+00> : vector<8x128xf32>
    %18 = tpu.matmul %17, %2, %cst_9 {dimension_numbers = #tpu.dot_dimension_numbers<[1], [0], [0], [1], [0, 0, 1, 1], [], []>} : vector<8x128xf32>, vector<128x128xf32>, vector<8x128xf32> -> vector<8x128xf32>
    %c1 = arith.constant 1 : index
    %c0_10 = arith.constant 0 : index
    %19 = vector.load %arg3[%c1, %c0_10] : memref<4x128xf32, #tpu.memory_space<vmem>>, vector<1x128xf32>
    %20 = vector.broadcast %19 : vector<1x128xf32> to vector<8x128xf32>
    %21 = arith.addf %18, %20 : vector<8x128xf32>
    %22 = math.tanh %21 : vector<8x128xf32>
    %23 = vector.shape_cast %7 : vector<1x128xi1> to vector<1x128xi1>
    %24 = vector.broadcast %23 : vector<1x128xi1> to vector<8x128xi1>
    %25 = arith.select %24, %22, %21 : vector<8x128xi1>, vector<8x128xf32>
    %cst_11 = arith.constant dense<0.000000e+00> : vector<8x32xf32>
    %26 = tpu.matmul %25, %3, %cst_11 {dimension_numbers = #tpu.dot_dimension_numbers<[1], [0], [0], [1], [0, 0, 1, 1], [], []>} : vector<8x128xf32>, vector<128x32xf32>, vector<8x32xf32> -> vector<8x32xf32>
    %c2 = arith.constant 2 : index
    %c0_12 = arith.constant 0 : index
    %27 = vector.load %arg3[%c2, %c0_12] : memref<4x128xf32, #tpu.memory_space<vmem>>, vector<1x32xf32>
    %28 = vector.broadcast %27 : vector<1x32xf32> to vector<8x32xf32>
    %29 = arith.addf %26, %28 : vector<8x32xf32>
    %cst_13 = arith.constant dense<0.000000e+00> : vector<8x32xf32>
    %30 = tpu.matmul %25, %4, %cst_13 {dimension_numbers = #tpu.dot_dimension_numbers<[1], [0], [0], [1], [0, 0, 1, 1], [], []>} : vector<8x128xf32>, vector<128x32xf32>, vector<8x32xf32> -> vector<8x32xf32>
    %c3 = arith.constant 3 : index
    %c0_14 = arith.constant 0 : index
    %31 = vector.load %arg3[%c3, %c0_14] : memref<4x128xf32, #tpu.memory_space<vmem>>, vector<1x32xf32>
    %32 = vector.broadcast %31 : vector<1x32xf32> to vector<8x32xf32>
    %33 = arith.addf %30, %32 : vector<8x32xf32>
    %34 = math.tanh %29 : vector<8x32xf32>
    %c0_15 = arith.constant 0 : index
    %c0_16 = arith.constant 0 : index
    %35 = vector.load %arg4[%c0_15, %c0_16] : memref<8x32xf32, #tpu.memory_space<vmem>>, vector<8x32xf32>
    tpu.vector_store %arg4[%c0_15, %c0_16], %34 {strides = array<i32>} : memref<8x32xf32, #tpu.memory_space<vmem>>, vector<8x32xf32>,
    %36 = math.tanh %33 : vector<8x32xf32>
    %c0_17 = arith.constant 0 : index
    %c0_18 = arith.constant 0 : index
    %37 = vector.load %arg5[%c0_17, %c0_18] : memref<8x32xf32, #tpu.memory_space<vmem>>, vector<8x32xf32>
    tpu.vector_store %arg5[%c0_17, %c0_18], %36 {strides = array<i32>} : memref<8x32xf32, #tpu.memory_space<vmem>>, vector<8x32xf32>,
    return
  }
  func.func @transform_0(%arg0: i32) -> (i32, i32) {
    %c0_i32 = arith.constant 0 : i32
    %c0_i32_0 = arith.constant 0 : i32
    return %arg0, %c0_i32 : i32, i32
  }
  func.func @transform_1(%arg0: i32) -> (i32, i32) {
    %c0_i32 = arith.constant 0 : i32
    %c0_i32_0 = arith.constant 0 : i32
    %c0_i32_1 = arith.constant 0 : i32
    return %c0_i32, %c0_i32_0 : i32, i32
  }
  func.func @transform_2(%arg0: i32) -> (i32, i32) {
    %c0_i32 = arith.constant 0 : i32
    %c0_i32_0 = arith.constant 0 : i32
    %c0_i32_1 = arith.constant 0 : i32
    return %c0_i32, %c0_i32_0 : i32, i32
  }
  func.func @transform_3(%arg0: i32) -> (i32, i32) {
    %c0_i32 = arith.constant 0 : i32
    %c0_i32_0 = arith.constant 0 : i32
    return %arg0, %c0_i32 : i32, i32
  }
  func.func @transform_4(%arg0: i32) -> (i32, i32) {
    %c0_i32 = arith.constant 0 : i32
    %c0_i32_0 = arith.constant 0 : i32
    return %arg0, %c0_i32 : i32, i32
  }
}

</mosaic_0001>

<llo_original>
// kernel: tpu_custom_call.1
$region0: #{tpu_custom_call.1}
  #allocation0 [shape = 'u32[]', space=smem, size = 0x4, offset = 0x4, fixed_abs, tag = 'smem constant byte address 0x4 - core index']
  #allocation1 [shape = 'u32[144,128]{1,0:T(1,128)}', space=vmem, size = 0x12000, scoped, tag = 'internal scratch']
  %s0 = inlined_call_operand.hbm [shape: f32[8,32], index: 0, kind: input, shape index: {}]
  %s1 = inlined_call_operand.hbm [shape: f32[416,128], index: 1, kind: input, shape index: {}]
  %s2 = inlined_call_operand.vmem [shape: f32[4,128], index: 2, kind: input, shape index: {}]
  %s3 = inlined_call_operand.hbm [shape: f32[8,32], index: 3, kind: output, shape index: {0}]
  %s4 = inlined_call_operand.hbm [shape: f32[8,32], index: 4, kind: output, shape index: {1}]
  %5 = xla_tuple %s3, %s4
  %s6 = sld [smem:[#allocation0]]
  $region38: #{tpu_custom_call.1} parent=0
    _
  %s8 = ssub.s32 1, %s6
  %s9 = scalar_select 0, %s8, %s6
  $region1: #{tpu_custom_call.1} parent=0
    #allocation2 [shape = 'u8[4096]{0}', space=vmem, size = 0x1000, scoped, tag = 'input window, operand 0, single buffered']
    #allocation3 [shape = 's32[1]{0}', space=sflag, size = 0x4, scoped, tag = 'scoped memory for tpu_custom_call.1']
    #allocation4 [shape = 's32[1]{0}', space=sflag, size = 0x4, scoped, tag = 'scoped memory for tpu_custom_call.1']
    #allocation5 [shape = 'u8[212992]{0}', space=vmem, size = 0x34000, scoped, tag = 'input window, operand 1, single buffered']
    #allocation6 [shape = 's32[1]{0}', space=sflag, size = 0x4, scoped, tag = 'scoped memory for tpu_custom_call.1']
    #allocation7 [shape = 'u8[4096]{0}', space=vmem, size = 0x1000, scoped, tag = 'output window, operand 0, single buffered']
    #allocation8 [shape = 'u8[4096]{0}', space=vmem, size = 0x1000, scoped, tag = 'output window, operand 1, single buffered']
    #allocation9 [shape = 's32[1]{0}', space=sflag, size = 0x4, scoped, tag = 'scoped memory for tpu_custom_call.1']
    %10 = vsyncpa [#allocation3], 0
    %11 = vsyncpa [#allocation6], 0
    %12 = vsyncpa [#allocation4], 0
    %13 = vsyncpa [#allocation9], 0
    // Predicated region
    $region2: #{tpu_custom_call.1} parent=1 // pred_check
      _
    $region3: #{tpu_custom_call.1} parent=1 // pred_check_branch
      %15 = sbr.rel (0) target = $region5
    $region4: #{tpu_custom_call.1} parent=1 // pred_region
      %s17 = ssub.s32 128, 128
      %18 = vsyncadd [#allocation3], %s17
      %s20 = sshll.u32 [#allocation2], 4
      %s21 = int_to_ptr.vmem [resolvable:$true] %s20
      %23 = dma.hbm_to_vmem [thread:$0]  %s0, 128, %s21, [#allocation3]
    $region5: #{tpu_custom_call.1} parent=1 // pred_fallthru
      _
    // Predicated region
    $region6: #{tpu_custom_call.1} parent=1 // pred_check
      _
    $region7: #{tpu_custom_call.1} parent=1 // pred_check_branch
      %25 = sbr.rel (0) target = $region9
    $region8: #{tpu_custom_call.1} parent=1 // pred_region
      %s27 = ssub.s32 6656, 6656
      %28 = vsyncadd [#allocation6], %s27
      %s29 = sshll.u32 [#allocation5], 4
      %s30 = int_to_ptr.vmem [resolvable:$true] %s29
      %35 = dma.hbm_to_vmem [thread:$0]  %s1, 6656, %s30, [#allocation6], 128, 128, 8
    $region9: #{tpu_custom_call.1} parent=1 // pred_fallthru
      _
    // Predicated region
    $region10: #{tpu_custom_call.1} parent=1 // pred_check
      _
    $region11: #{tpu_custom_call.1} parent=1 // pred_check_branch
      %37 = sbr.rel (0) target = $region13
    $region12: #{tpu_custom_call.1} parent=1 // pred_region
      _
    $region13: #{tpu_custom_call.1} parent=1 // pred_fallthru
      _
    // Predicated region
    $region14: #{tpu_custom_call.1} parent=1 // pred_check
      _
    $region15: #{tpu_custom_call.1} parent=1 // pred_check_branch
      %39 = sbr.rel (0) target = $region17
    $region16: #{tpu_custom_call.1} parent=1 // pred_region
      %40 = dma.done [#allocation3], 128
    $region17: #{tpu_custom_call.1} parent=1 // pred_fallthru
      _
    // Predicated region
    $region18: #{tpu_custom_call.1} parent=1 // pred_check
      _
    $region19: #{tpu_custom_call.1} parent=1 // pred_check_branch
      %42 = sbr.rel (0) target = $region21
    $region20: #{tpu_custom_call.1} parent=1 // pred_region
      %43 = dma.done [#allocation6], 6656
    $region21: #{tpu_custom_call.1} parent=1 // pred_fallthru
      _
    %v44 = vld [vmem:[#allocation2] sm:$0xff]
    %v45 = vld [vmem:[#allocation5] sm:$0xff]
    %v46 = vld [vmem:[#allocation5 + $0x8] sm:$0xff]
    %v47 = vld [vmem:[#allocation5 + $0x10] sm:$0xff]
    %v48 = vld [vmem:[#allocation5 + $0x18] sm:$0xff]
    %v49 = vld [vmem:[#allocation5 + $0x20] sm:$0xff]
    %v50 = vld [vmem:[#allocation5 + $0x28] sm:$0xff]
    %v51 = vld [vmem:[#allocation5 + $0x30] sm:$0xff]
    %v52 = vld [vmem:[#allocation5 + $0x38] sm:$0xff]
    %v53 = vld [vmem:[#allocation5 + $0x40] sm:$0xff]
    %v54 = vld [vmem:[#allocation5 + $0x48] sm:$0xff]
    %v55 = vld [vmem:[#allocation5 + $0x50] sm:$0xff]
    %v56 = vld [vmem:[#allocation5 + $0x58] sm:$0xff]
    %v57 = vld [vmem:[#allocation5 + $0x60] sm:$0xff]
    %v58 = vld [vmem:[#allocation5 + $0x68] sm:$0xff]
    %v59 = vld [vmem:[#allocation5 + $0x70] sm:$0xff]
    %v60 = vld [vmem:[#allocation5 + $0x78] sm:$0xff]
    %v61 = vld [vmem:[#allocation5 + $0x80] sm:$0xff]
    %v62 = vld [vmem:[#allocation5 + $0x88] sm:$0xff]
    %v63 = vld [vmem:[#allocation5 + $0x90] sm:$0xff]
    %v64 = vld [vmem:[#allocation5 + $0x98] sm:$0xff]
    %v65 = vld [vmem:[#allocation5 + $0xa0] sm:$0xff]
    %v66 = vld [vmem:[#allocation5 + $0xa8] sm:$0xff]
    %v67 = vld [vmem:[#allocation5 + $0xb0] sm:$0xff]
    %v68 = vld [vmem:[#allocation5 + $0xb8] sm:$0xff]
    %v69 = vld [vmem:[#allocation5 + $0xc0] sm:$0xff]
    %v70 = vld [vmem:[#allocation5 + $0xc8] sm:$0xff]
    %v71 = vld [vmem:[#allocation5 + $0xd0] sm:$0xff]
    %v72 = vld [vmem:[#allocation5 + $0xd8] sm:$0xff]
    %v73 = vld [vmem:[#allocation5 + $0xe0] sm:$0xff]
    %v74 = vld [vmem:[#allocation5 + $0xe8] sm:$0xff]
    %v75 = vld [vmem:[#allocation5 + $0xf0] sm:$0xff]
    %v76 = vld [vmem:[#allocation5 + $0xf8] sm:$0xff]
    %v77 = vld [vmem:[#allocation5 + $0x100] sm:$0xff]
    %v78 = vld [vmem:[#allocation5 + $0x108] sm:$0xff]
    %v79 = vld [vmem:[#allocation5 + $0x110] sm:$0xff]
    %v80 = vld [vmem:[#allocation5 + $0x118] sm:$0xff]
    %v81 = vld [vmem:[#allocation5 + $0x120] sm:$0xff]
    %v82 = vld [vmem:[#allocation5 + $0x128] sm:$0xff]
    %v83 = vld [vmem:[#allocation5 + $0x130] sm:$0xff]
    %v84 = vld [vmem:[#allocation5 + $0x138] sm:$0xff]
    %v85 = vld [vmem:[#allocation5 + $0x140] sm:$0xff]
    %v86 = vld [vmem:[#allocation5 + $0x148] sm:$0xff]
    %v87 = vld [vmem:[#allocation5 + $0x150] sm:$0xff]
    %v88 = vld [vmem:[#allocation5 + $0x158] sm:$0xff]
    %v89 = vld [vmem:[#allocation5 + $0x160] sm:$0xff]
    %v90 = vld [vmem:[#allocation5 + $0x168] sm:$0xff]
    %v91 = vld [vmem:[#allocation5 + $0x170] sm:$0xff]
    %v92 = vld [vmem:[#allocation5 + $0x178] sm:$0xff]
    %v93 = vld [vmem:[#allocation5 + $0x180] sm:$0xff]
    %v94 = vld [vmem:[#allocation5 + $0x188] sm:$0xff]
    %v95 = vld [vmem:[#allocation5 + $0x190] sm:$0xff]
    %v96 = vld [vmem:[#allocation5 + $0x198] sm:$0xff]
    %v97 = vlaneseq
    %v98 = vand.u32 %v97, 127
    %vm99 = vcmp.lt.s32.totalorder %v98, 64
    %v100 = vld [vmem:[%s2] sm:$0x1]
    %v101 = vlaneseq
    %v102 = vshrl.u32 %v101, 7
    %v103 = vsub.s32 0, %v102
    %v104 = vrot.slane %v100, %v103
    %vm105 = vcmask 261120
    %v107 = vsel %vm105, %v44, 0
    %109 = vmatprep.subr.mxu0 0.0
    %110 = vmatpush1.msra.mxu0 %v45
    %111 = vmatprep.subr.mxu0 0.0
    %112 = vmatpush1.msra.mxu0 %v46
    %113 = vmatprep.subr.mxu0 0.0
    %114 = vmatpush1.msra.mxu0 %v47
    %115 = vmatprep.subr.mxu0 0.0
    %116 = vmatpush1.msra.mxu0 %v48
    %117 = vmatprep.subr.mxu0 0.0
    %118 = vmatpush1.msra.mxu0 0.0
    %119 = vmatprep.subr.mxu0 0.0
    %120 = vmatpush1.msra.mxu0 0.0
    %121 = vmatprep.subr.mxu0 0.0
    %122 = vmatpush1.msra.mxu0 0.0
    %123 = vmatprep.subr.mxu0 0.0
    %124 = vmatpush1.msra.mxu0 0.0
    %125 = vmatprep.subr.mxu0 0.0
    %126 = vmatpush1.msra.mxu0 0.0
    %127 = vmatprep.subr.mxu0 0.0
    %128 = vmatpush1.msra.mxu0 0.0
    %129 = vmatprep.subr.mxu0 0.0
    %130 = vmatpush1.msra.mxu0 0.0
    %131 = vmatprep.subr.mxu0 0.0
    %132 = vmatpush1.msra.mxu0 0.0
    %133 = vmatprep.subr.mxu0 0.0
    %134 = vmatpush1.msra.mxu0 0.0
    %135 = vmatprep.subr.mxu0 0.0
    %136 = vmatpush1.msra.mxu0 0.0
    %137 = vmatprep.subr.mxu0 0.0
    %138 = vmatpush1.msra.mxu0 0.0
    %139 = vmatprep.subr.mxu0 0.0
    %140 = vmatpush1.msra.mxu0 0.0
    %141 = vmatprep.subr.mxu0 0.0
    %142 = vmatpush1.msra.mxu0 0.0
    %143 = vmatprep.subr.mxu0 0.0
    %144 = vmatpush1.msra.mxu0 0.0
    %145 = vmatprep.subr.mxu0 0.0
    %146 = vmatpush1.msra.mxu0 0.0
    %147 = vmatprep.subr.mxu0 0.0
    %148 = vmatpush1.msra.mxu0 0.0
    %149 = vmatprep.subr.mxu0 0.0
    %150 = vmatpush1.msra.mxu0 0.0
    %151 = vmatprep.subr.mxu0 0.0
    %152 = vmatpush1.msra.mxu0 0.0
    %153 = vmatprep.subr.mxu0 0.0
    %154 = vmatpush1.msra.mxu0 0.0
    %155 = vmatprep.subr.mxu0 0.0
    %156 = vmatpush1.msra.mxu0 0.0
    %157 = vmatprep.subr.mxu0 0.0
    %158 = vmatpush1.msra.mxu0 0.0
    %159 = vmatprep.subr.mxu0 0.0
    %160 = vmatpush1.msra.mxu0 0.0
    %161 = vmatprep.subr.mxu0 0.0
    %162 = vmatpush1.msra.mxu0 0.0
    %163 = vmatprep.subr.mxu0 0.0
    %164 = vmatpush1.msra.mxu0 0.0
    %165 = vmatprep.subr.mxu0 0.0
    %166 = vmatpush1.msra.mxu0 0.0
    %167 = vmatprep.subr.mxu0 0.0
    %168 = vmatpush1.msra.mxu0 0.0
    %169 = vmatprep.subr.mxu0 0.0
    %170 = vmatpush1.msra.mxu0 0.0
    %171 = vmatprep.subr.mxu0 0.0
    %172 = vmatpush1.msra.mxu0 0.0
    %173 = vmatprep.mubr.f32.mxu0 0.0
    %174 = vmatmul.mubr.f32.gmra.mrb[0].mxu0 %v107
    %v175 = vpop.f32.mrb[0].mxu0
    %v176 = vadd.f32 %v104, %v175
    %v177 = vpop.f32.mrb[0].mxu0
    %178 = vdwg.mxu0
    %v179 = vtanh.pop %v176
    %v180 = vmax.f32 %v176, 0.0
    %v181 = vsel %vm99, 1, 0
    %vm182 = vcmp.eq.s32.totalorder %v181, 1
    %v183 = vsel %vm182, %v179, %v180
    %v184 = vld [vmem:[%s2 + $0x1] sm:$0x1]
    %v185 = vlaneseq
    %v186 = vshrl.u32 %v185, 7
    %v187 = vsub.s32 0, %v186
    %v188 = vrot.slane %v184, %v187
    %189 = vmatprep.subr.mxu0 0.0
    %190 = vmatpush1.msra.mxu0 %v49
    %191 = vmatprep.subr.mxu0 0.0
    %192 = vmatpush1.msra.mxu0 %v50
    %193 = vmatprep.subr.mxu0 0.0
    %194 = vmatpush1.msra.mxu0 %v51
    %195 = vmatprep.subr.mxu0 0.0
    %196 = vmatpush1.msra.mxu0 %v52
    %197 = vmatprep.subr.mxu0 0.0
    %198 = vmatpush1.msra.mxu0 %v53
    %199 = vmatprep.subr.mxu0 0.0
    %200 = vmatpush1.msra.mxu0 %v54
    %201 = vmatprep.subr.mxu0 0.0
    %202 = vmatpush1.msra.mxu0 %v55
    %203 = vmatprep.subr.mxu0 0.0
    %204 = vmatpush1.msra.mxu0 %v56
    %205 = vmatprep.subr.mxu0 0.0
    %206 = vmatpush1.msra.mxu0 %v57
    %207 = vmatprep.subr.mxu0 0.0
    %208 = vmatpush1.msra.mxu0 %v58
    %209 = vmatprep.subr.mxu0 0.0
    %210 = vmatpush1.msra.mxu0 %v59
    %211 = vmatprep.subr.mxu0 0.0
    %212 = vmatpush1.msra.mxu0 %v60
    %213 = vmatprep.subr.mxu0 0.0
    %214 = vmatpush1.msra.mxu0 %v61
    %215 = vmatprep.subr.mxu0 0.0
    %216 = vmatpush1.msra.mxu0 %v62
    %217 = vmatprep.subr.mxu0 0.0
    %218 = vmatpush1.msra.mxu0 %v63
    %219 = vmatprep.subr.mxu0 0.0
    %220 = vmatpush1.msra.mxu0 %v64
    %221 = vmatprep.subr.mxu0 0.0
    %222 = vmatpush1.msra.mxu0 0.0
    %223 = vmatprep.subr.mxu0 0.0
    %224 = vmatpush1.msra.mxu0 0.0
    %225 = vmatprep.subr.mxu0 0.0
    %226 = vmatpush1.msra.mxu0 0.0
    %227 = vmatprep.subr.mxu0 0.0
    %228 = vmatpush1.msra.mxu0 0.0
    %229 = vmatprep.subr.mxu0 0.0
    %230 = vmatpush1.msra.mxu0 0.0
    %231 = vmatprep.subr.mxu0 0.0
    %232 = vmatpush1.msra.mxu0 0.0
    %233 = vmatprep.subr.mxu0 0.0
    %234 = vmatpush1.msra.mxu0 0.0
    %235 = vmatprep.subr.mxu0 0.0
    %236 = vmatpush1.msra.mxu0 0.0
    %237 = vmatprep.subr.mxu0 0.0
    %238 = vmatpush1.msra.mxu0 0.0
    %239 = vmatprep.subr.mxu0 0.0
    %240 = vmatpush1.msra.mxu0 0.0
    %241 = vmatprep.subr.mxu0 0.0
    %242 = vmatpush1.msra.mxu0 0.0
    %243 = vmatprep.subr.mxu0 0.0
    %244 = vmatpush1.msra.mxu0 0.0
    %245 = vmatprep.subr.mxu0 0.0
    %246 = vmatpush1.msra.mxu0 0.0
    %247 = vmatprep.subr.mxu0 0.0
    %248 = vmatpush1.msra.mxu0 0.0
    %249 = vmatprep.subr.mxu0 0.0
    %250 = vmatpush1.msra.mxu0 0.0
    %251 = vmatprep.subr.mxu0 0.0
    %252 = vmatpush1.msra.mxu0 0.0
    %253 = vmatprep.mubr.f32.mxu0 0.0
    %254 = vmatmul.mubr.f32.gmra.mrb[0].mxu0 %v183
    %v255 = vpop.f32.mrb[0].mxu0
    %v256 = vadd.f32 %v188, %v255
    %v257 = vpop.f32.mrb[0].mxu0
    %258 = vdwg.mxu0
    %v259 = vtanh.pop %v256
    %v260 = vsel %vm182, %v259, %v256
    %v261 = vld [vmem:[%s2 + $0x2] sm:$0x1]
    %v262 = vlaneseq
    %v263 = vshrl.u32 %v262, 7
    %v264 = vsub.s32 0, %v263
    %v265 = vrot.slane %v261, %v264
    %266 = vmatprep.subr.mxu0 0.0
    %267 = vmatpush1.msra.mxu0 %v65
    %268 = vmatprep.subr.mxu0 0.0
    %269 = vmatpush1.msra.mxu0 %v66
    %270 = vmatprep.subr.mxu0 0.0
    %271 = vmatpush1.msra.mxu0 %v67
    %272 = vmatprep.subr.mxu0 0.0
    %273 = vmatpush1.msra.mxu0 %v68
    %274 = vmatprep.subr.mxu0 0.0
    %275 = vmatpush1.msra.mxu0 %v69
    %276 = vmatprep.subr.mxu0 0.0
    %277 = vmatpush1.msra.mxu0 %v70
    %278 = vmatprep.subr.mxu0 0.0
    %279 = vmatpush1.msra.mxu0 %v71
    %280 = vmatprep.subr.mxu0 0.0
    %281 = vmatpush1.msra.mxu0 %v72
    %282 = vmatprep.subr.mxu0 0.0
    %283 = vmatpush1.msra.mxu0 %v73
    %284 = vmatprep.subr.mxu0 0.0
    %285 = vmatpush1.msra.mxu0 %v74
    %286 = vmatprep.subr.mxu0 0.0
    %287 = vmatpush1.msra.mxu0 %v75
    %288 = vmatprep.subr.mxu0 0.0
    %289 = vmatpush1.msra.mxu0 %v76
    %290 = vmatprep.subr.mxu0 0.0
    %291 = vmatpush1.msra.mxu0 %v77
    %292 = vmatprep.subr.mxu0 0.0
    %293 = vmatpush1.msra.mxu0 %v78
    %294 = vmatprep.subr.mxu0 0.0
    %295 = vmatpush1.msra.mxu0 %v79
    %296 = vmatprep.subr.mxu0 0.0
    %297 = vmatpush1.msra.mxu0 %v80
    %298 = vmatprep.subr.mxu0 0.0
    %299 = vmatpush1.msra.mxu0 0.0
    %300 = vmatprep.subr.mxu0 0.0
    %301 = vmatpush1.msra.mxu0 0.0
    %302 = vmatprep.subr.mxu0 0.0
    %303 = vmatpush1.msra.mxu0 0.0
    %304 = vmatprep.subr.mxu0 0.0
    %305 = vmatpush1.msra.mxu0 0.0
    %306 = vmatprep.subr.mxu0 0.0
    %307 = vmatpush1.msra.mxu0 0.0
    %308 = vmatprep.subr.mxu0 0.0
    %309 = vmatpush1.msra.mxu0 0.0
    %310 = vmatprep.subr.mxu0 0.0
    %311 = vmatpush1.msra.mxu0 0.0
    %312 = vmatprep.subr.mxu0 0.0
    %313 = vmatpush1.msra.mxu0 0.0
    %314 = vmatprep.subr.mxu0 0.0
    %315 = vmatpush1.msra.mxu0 0.0
    %316 = vmatprep.subr.mxu0 0.0
    %317 = vmatpush1.msra.mxu0 0.0
    %318 = vmatprep.subr.mxu0 0.0
    %319 = vmatpush1.msra.mxu0 0.0
    %320 = vmatprep.subr.mxu0 0.0
    %321 = vmatpush1.msra.mxu0 0.0
    %322 = vmatprep.subr.mxu0 0.0
    %323 = vmatpush1.msra.mxu0 0.0
    %324 = vmatprep.subr.mxu0 0.0
    %325 = vmatpush1.msra.mxu0 0.0
    %326 = vmatprep.subr.mxu0 0.0
    %327 = vmatpush1.msra.mxu0 0.0
    %328 = vmatprep.subr.mxu0 0.0
    %329 = vmatpush1.msra.mxu0 0.0
    %330 = vmatprep.mubr.f32.mxu0 0.0
    %331 = vmatmul.mubr.f32.gmra.mrb[0].mxu0 %v260
    %v332 = vpop.f32.mrb[0].mxu0
    %v333 = vadd.f32 %v265, %v332
    %v334 = vpop.f32.mrb[0].mxu0
    %335 = vdwg.mxu0
    %v336 = vld [vmem:[%s2 + $0x3] sm:$0x1]
    %v337 = vlaneseq
    %v338 = vshrl.u32 %v337, 7
    %v339 = vsub.s32 0, %v338
    %v340 = vrot.slane %v336, %v339
    %341 = vmatprep.subr.mxu0 0.0
    %342 = vmatpush1.msra.mxu0 %v81
    %343 = vmatprep.subr.mxu0 0.0
    %344 = vmatpush1.msra.mxu0 %v82
    %345 = vmatprep.subr.mxu0 0.0
    %346 = vmatpush1.msra.mxu0 %v83
    %347 = vmatprep.subr.mxu0 0.0
    %348 = vmatpush1.msra.mxu0 %v84
    %349 = vmatprep.subr.mxu0 0.0
    %350 = vmatpush1.msra.mxu0 %v85
    %351 = vmatprep.subr.mxu0 0.0
    %352 = vmatpush1.msra.mxu0 %v86
    %353 = vmatprep.subr.mxu0 0.0
    %354 = vmatpush1.msra.mxu0 %v87
    %355 = vmatprep.subr.mxu0 0.0
    %356 = vmatpush1.msra.mxu0 %v88
    %357 = vmatprep.subr.mxu0 0.0
    %358 = vmatpush1.msra.mxu0 %v89
    %359 = vmatprep.subr.mxu0 0.0
    %360 = vmatpush1.msra.mxu0 %v90
    %361 = vmatprep.subr.mxu0 0.0
    %362 = vmatpush1.msra.mxu0 %v91
    %363 = vmatprep.subr.mxu0 0.0
    %364 = vmatpush1.msra.mxu0 %v92
    %365 = vmatprep.subr.mxu0 0.0
    %366 = vmatpush1.msra.mxu0 %v93
    %367 = vmatprep.subr.mxu0 0.0
    %368 = vmatpush1.msra.mxu0 %v94
    %369 = vmatprep.subr.mxu0 0.0
    %370 = vmatpush1.msra.mxu0 %v95
    %371 = vmatprep.subr.mxu0 0.0
    %372 = vmatpush1.msra.mxu0 %v96
    %373 = vmatprep.subr.mxu0 0.0
    %374 = vmatpush1.msra.mxu0 0.0
    %375 = vmatprep.subr.mxu0 0.0
    %376 = vmatpush1.msra.mxu0 0.0
    %377 = vmatprep.subr.mxu0 0.0
    %378 = vmatpush1.msra.mxu0 0.0
    %379 = vmatprep.subr.mxu0 0.0
    %380 = vmatpush1.msra.mxu0 0.0
    %381 = vmatprep.subr.mxu0 0.0
    %382 = vmatpush1.msra.mxu0 0.0
    %383 = vmatprep.subr.mxu0 0.0
    %384 = vmatpush1.msra.mxu0 0.0
    %385 = vmatprep.subr.mxu0 0.0
    %386 = vmatpush1.msra.mxu0 0.0
    %387 = vmatprep.subr.mxu0 0.0
    %388 = vmatpush1.msra.mxu0 0.0
    %389 = vmatprep.subr.mxu0 0.0
    %390 = vmatpush1.msra.mxu0 0.0
    %391 = vmatprep.subr.mxu0 0.0
    %392 = vmatpush1.msra.mxu0 0.0
    %393 = vmatprep.subr.mxu0 0.0
    %394 = vmatpush1.msra.mxu0 0.0
    %395 = vmatprep.subr.mxu0 0.0
    %396 = vmatpush1.msra.mxu0 0.0
    %397 = vmatprep.subr.mxu0 0.0
    %398 = vmatpush1.msra.mxu0 0.0
    %399 = vmatprep.subr.mxu0 0.0
    %400 = vmatpush1.msra.mxu0 0.0
    %401 = vmatprep.subr.mxu0 0.0
    %402 = vmatpush1.msra.mxu0 0.0
    %403 = vmatprep.subr.mxu0 0.0
    %404 = vmatpush1.msra.mxu0 0.0
    %405 = vmatprep.mubr.f32.mxu0 0.0
    %406 = vmatmul.mubr.f32.gmra.mrb[0].mxu0 %v260
    %v407 = vpop.f32.mrb[0].mxu0
    %v408 = vadd.f32 %v340, %v407
    %v409 = vpop.f32.mrb[0].mxu0
    %410 = vdwg.mxu0
    %v411 = vtanh.pop %v333
    %412 = vst.msk [vmem:[#allocation7] sm:$0xff] %vm105, %v411
    %v413 = vtanh.pop %v408
    %414 = vst.msk [vmem:[#allocation8] sm:$0xff] %vm105, %v413
    // Predicated region
    $region22: #{tpu_custom_call.1} parent=1 // pred_check
      _
    $region23: #{tpu_custom_call.1} parent=1 // pred_check_branch
      %416 = sbr.rel (0) target = $region25
    $region24: #{tpu_custom_call.1} parent=1 // pred_region
      %s418 = ssub.s32 128, 128
      %419 = vsyncadd [#allocation4], %s418
      %s421 = sshll.u32 [#allocation7], 4
      %s422 = int_to_ptr.vmem [resolvable:$true] %s421
      %424 = dma.vmem_to_hbm [thread:$0]  %s422, 128, %s3, [#allocation4]
    $region25: #{tpu_custom_call.1} parent=1 // pred_fallthru
      _
    // Predicated region
    $region26: #{tpu_custom_call.1} parent=1 // pred_check
      _
    $region27: #{tpu_custom_call.1} parent=1 // pred_check_branch
      %426 = sbr.rel (0) target = $region29
    $region28: #{tpu_custom_call.1} parent=1 // pred_region
      %s428 = ssub.s32 128, 128
      %429 = vsyncadd [#allocation9], %s428
      %s431 = sshll.u32 [#allocation8], 4
      %s432 = int_to_ptr.vmem [resolvable:$true] %s431
      %434 = dma.vmem_to_hbm [thread:$0]  %s432, 128, %s4, [#allocation9]
    $region29: #{tpu_custom_call.1} parent=1 // pred_fallthru
      _
    // Predicated region
    $region30: #{tpu_custom_call.1} parent=1 // pred_check
      _
    $region31: #{tpu_custom_call.1} parent=1 // pred_check_branch
      %436 = sbr.rel (0) target = $region33
    $region32: #{tpu_custom_call.1} parent=1 // pred_region
      %437 = dma.done [#allocation4], 128
    $region33: #{tpu_custom_call.1} parent=1 // pred_fallthru
      _
    // Predicated region
    $region34: #{tpu_custom_call.1} parent=1 // pred_check
      _
    $region35: #{tpu_custom_call.1} parent=1 // pred_check_branch
      %439 = sbr.rel (0) target = $region37
    $region36: #{tpu_custom_call.1} parent=1 // pred_region
      %440 = dma.done [#allocation9], 128
    $region37: #{tpu_custom_call.1} parent=1 // pred_fallthru
      _
    %441 = vsyncpa [#allocation3], 1
    %442 = vsyncpa [#allocation6], 1
    %443 = vsyncpa [#allocation4], 1
    %444 = vsyncpa [#allocation9], 1

</llo_original>
